<compile_context>
chip_gen: v7x
topology: tpu7x:2x2x1
jax: 0.10.0
libtpu: 0.0.40
codegen_flags: <defaults>
</compile_context>

<pallas_src>
import functools

import jax
import jax.numpy as jnp
from jax.experimental import pallas as pl
from jax.experimental.pallas import tpu as pltpu

LANE = 128                    # pad feature/class dims to multiples of the lane width
TILE_I = 128                  # destination-node tile
TILE_J = 128                  # source-node tile
NEG_INF = -1e30               # finite "masked" logit, kept in f32 (never cast to bf16)
VMEM_LIMIT = 32 * 1024 * 1024 # explicit scoped-VMEM budget (safe on v5e/v6e/v7x)


def _round_up(n, m):
    return (n + m - 1) // m * m


# ---------------------------------------------------------------------------
# Kernel 1: fused projection   xcat = x @ [Wl | Wr | Wlin] + [bl | br | blin']
# ---------------------------------------------------------------------------
def _fused_proj_kernel(x_ref, w_ref, b_ref, o_ref):
    x = x_ref[...].astype(jnp.bfloat16)                       # bf16 into the MXU
    acc = jnp.dot(x, w_ref[...], preferred_element_type=jnp.float32)
    o_ref[...] = (acc + b_ref[...]).astype(o_ref.dtype)


def fused_projection(x, w_cat, b_cat, *, tile_m=TILE_I):
    n_pad, f_pad = x.shape
    out_w = w_cat.shape[1]
    return pl.pallas_call(
        _fused_proj_kernel,
        out_shape=jax.ShapeDtypeStruct((n_pad, out_w), jnp.bfloat16),
        grid_spec=pltpu.PrefetchScalarGridSpec(
            num_scalar_prefetch=0,
            grid=(n_pad // tile_m,),
            in_specs=[
                pl.BlockSpec((tile_m, f_pad), lambda i: (i, 0)),
                pl.BlockSpec((f_pad, out_w), lambda i: (0, 0)),
                pl.BlockSpec((1, out_w), lambda i: (0, 0)),
            ],
            out_specs=pl.BlockSpec((tile_m, out_w), lambda i: (i, 0)),
        ),
        compiler_params=pltpu.CompilerParams(
            dimension_semantics=("parallel",),
            vmem_limit_bytes=VMEM_LIMIT,
        ),
    )(x, w_cat, b_cat)


# ---------------------------------------------------------------------------
# Kernel 2: tiled GATv2 attention + Linear skip, flash-style online softmax,
#           with a scalar-prefetched block-sparsity skip over empty adj tiles.
# ---------------------------------------------------------------------------
def _gatv2_attn_kernel(cnt_ref, xr_ref, lin_ref, xl_ref, xlt_ref, adj_ref, att_ref,
                       o_ref, m_sc, l_sc, acc_sc, *, c_real, mode):
    i = pl.program_id(0)
    j = pl.program_id(1)
    nj = pl.num_programs(1)

    @pl.when(j == 0)
    def _init():
        m_sc[...] = jnp.full(m_sc.shape, NEG_INF, jnp.float32)
        l_sc[...] = jnp.zeros(l_sc.shape, jnp.float32)
        acc_sc[...] = jnp.zeros(acc_sc.shape, jnp.float32)

    # Skip all pairwise work on adjacency tiles with no edges: their softmax
    # contribution is exactly zero (numerically identical to processing them).
    has_edges = cnt_ref[i * nj + j] > 0

    @pl.when(has_edges)
    def _update():
        xr = xr_ref[...].astype(jnp.float32)      # (TI, Cp)  destination projections
        xlt = xlt_ref[...].astype(jnp.float32)    # (Cp, TJ)  source projections, transposed
        att04 = att_ref[...]                      # (1, Cp)   0.4 * attention vector (f32)
        mask = adj_ref[...] > 0                   # (TI, TJ)  computed once, reused below

        # GATv2 logits via leaky_relu(v) = 0.6*v + 0.4*|v| (slope 0.2):
        #   e[i,j] = 0.6*att.xr[i] + 0.6*att.xl[j] + sum_c 0.4*att_c*|xr[i,c]+xl[j,c]|
        # The two linear terms live in the stashed column `c_real` of xr / xlt
        # (folded into the fused projection weights).  Only REAL channels are looped.
        e = xr[:, c_real:c_real + 1] + xlt[c_real:c_real + 1, :]          # (TI, TJ)
        for c in range(c_real):                   # static unroll (LLO-visible, 2D tiles)
            e = e + att04[0:1, c:c + 1] * jnp.abs(xr[:, c:c + 1] + xlt[c:c + 1, :])
        e = jnp.where(mask, e, NEG_INF)           # mask in f32

        # Online softmax over source tiles (running max / denominator / numerator).
        m_prev = m_sc[...]
        m_new = jnp.maximum(m_prev, jnp.max(e, axis=-1, keepdims=True))
        corr = jnp.exp(m_prev - m_new)
        p = jnp.exp(e - m_new)
        p = jnp.where(mask, p, 0.0)
        l_sc[...] = corr * l_sc[...] + jnp.sum(p, axis=-1, keepdims=True)
        acc_sc[...] = corr * acc_sc[...] + jnp.dot(
            p.astype(jnp.bfloat16), xl_ref[...], preferred_element_type=jnp.float32)
        m_sc[...] = m_new

    @pl.when(j == nj - 1)
    def _finalize():
        inv_l = pl.reciprocal(jnp.maximum(l_sc[...], 1e-30), approx=True)
        # lin already carries the GATv2 bias (folded into the skip bias at prep time).
        y = acc_sc[...] * inv_l + lin_ref[...].astype(jnp.float32)
        if mode == "relu":
            y = jnp.maximum(y, 0.0)
        else:  # masked log_softmax over the real (unpadded) classes only
            col = jax.lax.broadcasted_iota(jnp.int32, y.shape, 1)
            ym = jnp.where(col < c_real, y, NEG_INF)
            mx = jnp.max(ym, axis=-1, keepdims=True)
            lse = mx + jnp.log(jnp.sum(jnp.exp(ym - mx), axis=-1, keepdims=True))
            y = y - lse
        o_ref[...] = y.astype(o_ref.dtype)


def gatv2_attention(xcat, xlt, adj, blk_cnt, att04, *, c_real, mode, out_dtype,
                    tile_i=TILE_I, tile_j=TILE_J):
    n_pad = adj.shape[0]
    c_pad = xlt.shape[0]
    kernel = functools.partial(_gatv2_attn_kernel, c_real=c_real, mode=mode)
    return pl.pallas_call(
        kernel,
        out_shape=jax.ShapeDtypeStruct((n_pad, c_pad), out_dtype),
        grid_spec=pltpu.PrefetchScalarGridSpec(
            num_scalar_prefetch=1,                            # block-edge counts (SMEM)
            grid=(n_pad // tile_i, n_pad // tile_j),
            in_specs=[
                pl.BlockSpec((tile_i, c_pad), lambda i, j, cnt: (i, 1)),   # x_r (dst)
                pl.BlockSpec((tile_i, c_pad), lambda i, j, cnt: (i, 2)),   # lin skip (dst)
                pl.BlockSpec((tile_j, c_pad), lambda i, j, cnt: (j, 0)),   # x_l (src)
                pl.BlockSpec((c_pad, tile_j), lambda i, j, cnt: (0, j)),   # x_l transposed
                pl.BlockSpec((tile_i, tile_j), lambda i, j, cnt: (i, j)),  # adjacency mask
                pl.BlockSpec((1, c_pad), lambda i, j, cnt: (0, 0)),        # 0.4 * att
            ],
            out_specs=pl.BlockSpec((tile_i, c_pad), lambda i, j, cnt: (i, 0)),
            scratch_shapes=[
                pltpu.VMEM((tile_i, 1), jnp.float32),      # running row max
                pltpu.VMEM((tile_i, 1), jnp.float32),      # running denominator
                pltpu.VMEM((tile_i, c_pad), jnp.float32),  # running numerator
            ],
        ),
        compiler_params=pltpu.CompilerParams(
            dimension_semantics=("parallel", "arbitrary"),  # dst axis -> 2 TCs on v7x
            vmem_limit_bytes=VMEM_LIMIT,
        ),
    )(blk_cnt, xcat, xcat, xcat, xlt, adj, att04)


# ---------------------------------------------------------------------------
# Parameter preparation (plain JAX glue: pad + fuse + fold the linear logit term)
# ---------------------------------------------------------------------------
def _build_layer(wl, bl, wr, br, att, bgat, wlin, blin, *, f_pad):
    f_in, c = wl.shape
    c_pad = _round_up(c + 1, LANE)            # +1: room for the folded linear term
    a = att.reshape(c)

    def block(w, b, fold):
        wp = jnp.zeros((f_pad, c_pad), jnp.float32).at[:f_in, :c].set(w)
        bp = jnp.zeros((1, c_pad), jnp.float32).at[0, :c].set(b.reshape(c))
        if fold:  # column c_real <- 0.6 * att . (x@W + b)   (linear logit term)
            wp = wp.at[:f_in, c].set(0.6 * (w @ a))
            bp = bp.at[0, c].set(0.6 * jnp.dot(b.reshape(c), a))
        return wp, bp

    wl_p, bl_p = block(wl, bl, True)
    wr_p, br_p = block(wr, br, True)
    # GATv2 bias folded into the Linear-skip bias (both are per-channel adds).
    wlin_p, blin_p = block(wlin, blin + bgat.reshape(1, c), False)
    w_cat = jnp.concatenate([wl_p, wr_p, wlin_p], axis=1).astype(jnp.bfloat16)
    b_cat = jnp.concatenate([bl_p, br_p, blin_p], axis=1)
    att04 = jnp.zeros((1, c_pad), jnp.float32).at[0, :c].set(0.4 * a)
    return w_cat, b_cat, att04, c, c_pad


def _run_layer(x_pad, adj_pad, blk_cnt, layer, *, mode, out_dtype):
    w_cat, b_cat, att04, c_real, c_pad = layer
    xcat = fused_projection(x_pad, w_cat, b_cat)      # (Np, 3*Cp) bf16: [x_l|x_r|lin]
    xlt = jnp.transpose(xcat[:, :c_pad])              # glue: (Cp, Np) transposed x_l
    return gatv2_attention(xcat, xlt, adj_pad, blk_cnt, att04,
                           c_real=c_real, mode=mode, out_dtype=out_dtype)


def edge_index_to_adj(edge_index, n_pad):
    """Dense bf16 mask adj[dst, src] = 1, self-loops on every (incl. padded) node."""
    adj = jnp.zeros((n_pad, n_pad), jnp.float32)
    adj = adj.at[edge_index[1], edge_index[0]].set(1.0)
    idx = jnp.arange(n_pad)
    adj = adj.at[idx, idx].set(1.0)
    return adj.astype(jnp.bfloat16)


def adj_block_counts(adj, tile_i=TILE_I, tile_j=TILE_J):
    """Flat int32 bitmap: 1 iff the (dst_tile, src_tile) adjacency block has edges."""
    n = adj.shape[0]
    ni, nj = n // tile_i, n // tile_j
    blk = jnp.any(adj.reshape(ni, tile_i, nj, tile_j) > 0, axis=(1, 3))
    return blk.astype(jnp.int32).reshape(-1)


def gatv3_forward(x, edge_index, params):
    """GATv3Convolution.forward -> (log_softmax(conv2(h)+lin2(h)), edge_index)."""
    n, f = x.shape
    n_pad = _round_up(n, TILE_I)
    f_pad = _round_up(f, LANE)

    layer1 = _build_layer(params["wl1"], params["bl1"], params["wr1"], params["br1"],
                          params["att1"], params["bgat1"], params["wlin1"],
                          params["blin1"], f_pad=f_pad)
    c_pad1 = layer1[4]
    layer2 = _build_layer(params["wl2"], params["bl2"], params["wr2"], params["br2"],
                          params["att2"], params["bgat2"], params["wlin2"],
                          params["blin2"], f_pad=c_pad1)
    num_classes = params["wl2"].shape[1]

    x_pad = jnp.zeros((n_pad, f_pad), jnp.float32).at[:n, :f].set(x)
    adj_pad = edge_index_to_adj(edge_index, n_pad)    # single bf16 mask, reused twice
    blk_cnt = adj_block_counts(adj_pad)               # SMEM block-sparsity bitmap

    # TODO(synk): F.dropout is identity at inference (training=False); not implemented.
    h = _run_layer(x_pad, adj_pad, blk_cnt, layer1, mode="relu", out_dtype=jnp.bfloat16)
    out = _run_layer(h, adj_pad, blk_cnt, layer2, mode="log_softmax",
                     out_dtype=jnp.float32)
    return out[:n, :num_classes], edge_index


# ---------------------------------------------------------------------------
# Synthetic parameters + pure-JAX reference
# ---------------------------------------------------------------------------
def init_gatv3_params(key, num_features, hidden_units, num_classes):
    def glorot(k, fan_in, fan_out):
        scale = jnp.sqrt(2.0 / (fan_in + fan_out))
        return jax.random.normal(k, (fan_in, fan_out), jnp.float32) * scale

    ks = jax.random.split(key, 12)
    p = {}
    p["wl1"] = glorot(ks[0], num_features, hidden_units)
    p["bl1"] = jnp.zeros((1, hidden_units), jnp.float32)
    p["wr1"] = glorot(ks[1], num_features, hidden_units)
    p["br1"] = jnp.zeros((1, hidden_units), jnp.float32)
    p["att1"] = glorot(ks[2], 1, hidden_units)
    p["bgat1"] = jnp.zeros((1, hidden_units), jnp.float32)
    p["wlin1"] = glorot(ks[3], num_features, hidden_units)
    p["blin1"] = 0.01 * jax.random.normal(ks[4], (1, hidden_units), jnp.float32)
    p["wl2"] = glorot(ks[5], hidden_units, num_classes)
    p["bl2"] = jnp.zeros((1, num_classes), jnp.float32)
    p["wr2"] = glorot(ks[6], hidden_units, num_classes)
    p["br2"] = jnp.zeros((1, num_classes), jnp.float32)
    p["att2"] = glorot(ks[7], 1, num_classes)
    p["bgat2"] = jnp.zeros((1, num_classes), jnp.float32)
    p["wlin2"] = glorot(ks[8], hidden_units, num_classes)
    p["blin2"] = 0.01 * jax.random.normal(ks[9], (1, num_classes), jnp.float32)
    return p


def _reference_forward(x, edge_index, params):
    """Dense pure-JAX GATv2 + skip reference (mirrors the kernels' bf16 storage)."""
    bf16, f32 = jnp.bfloat16, jnp.float32
    n = x.shape[0]
    adj = jnp.zeros((n, n), f32).at[edge_index[1], edge_index[0]].set(1.0)
    adj = adj.at[jnp.arange(n), jnp.arange(n)].set(1.0)

    def layer(h, wl, bl, wr, br, att, bgat, wlin, blin, mode):
        hb = h.astype(bf16)

        def proj(w, b):
            y = jnp.dot(hb, w.astype(bf16), preferred_element_type=f32) + b
            return y.astype(bf16).astype(f32)

        xl, xr, lin = proj(wl, bl), proj(wr, br), proj(wlin, blin)
        a = att.reshape(-1)
        s = xr[:, None, :] + xl[None, :, :]
        s = jnp.where(s > 0, s, 0.2 * s)
        e = jnp.einsum("ijc,c->ij", s, a)
        e = jnp.where(adj > 0, e, NEG_INF)
        alpha = jax.nn.softmax(e, axis=-1)
        alpha = jnp.where(adj > 0, alpha, 0.0)
        y = alpha @ xl + bgat + lin
        return jax.nn.relu(y) if mode == "relu" else jax.nn.log_softmax(y, axis=-1)

    h = layer(x, params["wl1"], params["bl1"], params["wr1"], params["br1"],
              params["att1"], params["bgat1"], params["wlin1"], params["blin1"],
              "relu")
    return layer(h, params["wl2"], params["bl2"], params["wr2"], params["br2"],
                 params["att2"], params["bgat2"], params["wlin2"], params["blin2"],
                 "log_softmax")


if __name__ == "__main__":
    key = jax.random.PRNGKey(0)
    k_x, k_e, k_p = jax.random.split(key, 3)

    num_nodes, num_features, hidden_units, num_classes, num_edges = 16, 8, 32, 4, 40

    x = jax.random.normal(k_x, (num_nodes, num_features), jnp.float32)
    edge_index = jax.random.randint(k_e, (2, num_edges), 0, num_nodes, jnp.int32)
    params = init_gatv3_params(k_p, num_features, hidden_units, num_classes)

    logp, ei = gatv3_forward(x, edge_index, params)
    logp = jax.block_until_ready(logp)

    assert logp.shape == (num_nodes, num_classes)
    assert bool(jnp.all(jnp.isfinite(logp)))
    # rows of log_softmax must sum (in prob space) to ~1
    assert jnp.allclose(jnp.exp(logp).sum(axis=1), 1.0, atol=1e-3)
    # structural sanity check vs a pure-JAX dense reference (loose tol: bf16 storage)
    ref = _reference_forward(x, edge_index, params)
    assert jnp.allclose(logp, ref, atol=0.1, rtol=0.1), \
        float(jnp.max(jnp.abs(logp - ref)))
    print("KERNEL_OK")
</pallas_src>

<mosaic_0001>
module attributes {stable_mosaic.version = 11 : i64} {
  func.func @_fused_proj_kernel(%arg0: i32, %arg1: memref<128x128xf32, #tpu.memory_space<vmem>>, %arg2: memref<128x384xbf16, #tpu.memory_space<vmem>>, %arg3: memref<1x384xf32, #tpu.memory_space<vmem>>, %arg4: memref<128x384xbf16, #tpu.memory_space<vmem>>) attributes {dimension_semantics = [#tpu.dimension_semantics<parallel>], iteration_bounds = array<i64: 1>, scalar_prefetch = 0 : i64, scratch_operands = 0 : i64, tpu.core_type = #tpu.core_type<tc>, window_params = [{transform_indices = @transform_0, window_bounds = array<i64: 128, 128>}, {pipeline_mode = #tpu.pipeline_mode<synchronous>, transform_indices = @transform_1, window_bounds = array<i64: 128, 384>}, {pipeline_mode = #tpu.pipeline_mode<synchronous>, transform_indices = @transform_2, window_bounds = array<i64: 1, 384>}, {transform_indices = @transform_3, window_bounds = array<i64: 128, 384>}]} {
    %c0 = arith.constant 0 : index
    %c0_0 = arith.constant 0 : index
    %0 = vector.load %arg1[%c0, %c0_0] : memref<128x128xf32, #tpu.memory_space<vmem>>, vector<128x128xf32>
    %1 = arith.truncf %0 : vector<128x128xf32> to vector<128x128xbf16>
    %c0_1 = arith.constant 0 : index
    %c0_2 = arith.constant 0 : index
    %2 = vector.load %arg2[%c0_1, %c0_2] : memref<128x384xbf16, #tpu.memory_space<vmem>>, vector<128x384xbf16>
    %cst = arith.constant dense<0.000000e+00> : vector<128x384xf32>
    %3 = tpu.matmul %1, %2, %cst {dimension_numbers = #tpu.dot_dimension_numbers<[1], [0], [0], [1], [0, 0, 1, 1], [], []>} : vector<128x128xbf16>, vector<128x384xbf16>, vector<128x384xf32> -> vector<128x384xf32>
    %c0_3 = arith.constant 0 : index
    %c0_4 = arith.constant 0 : index
    %4 = vector.load %arg3[%c0_3, %c0_4] : memref<1x384xf32, #tpu.memory_space<vmem>>, vector<1x384xf32>
    %5 = vector.broadcast %4 : vector<1x384xf32> to vector<128x384xf32>
    %6 = arith.addf %3, %5 : vector<128x384xf32>
    %7 = arith.truncf %6 : vector<128x384xf32> to vector<128x384xbf16>
    %c0_5 = arith.constant 0 : index
    %c0_6 = arith.constant 0 : index
    %8 = vector.load %arg4[%c0_5, %c0_6] : memref<128x384xbf16, #tpu.memory_space<vmem>>, vector<128x384xbf16>
    tpu.vector_store %arg4[%c0_5, %c0_6], %7 {strides = array<i32>} : memref<128x384xbf16, #tpu.memory_space<vmem>>, vector<128x384xbf16>,
    return
  }
  func.func @transform_0(%arg0: i32) -> (i32, i32) {
    %c0_i32 = arith.constant 0 : i32
    %c0_i32_0 = arith.constant 0 : i32
    return %arg0, %c0_i32 : i32, i32
  }
  func.func @transform_1(%arg0: i32) -> (i32, i32) {
    %c0_i32 = arith.constant 0 : i32
    %c0_i32_0 = arith.constant 0 : i32
    %c0_i32_1 = arith.constant 0 : i32
    return %c0_i32, %c0_i32_0 : i32, i32
  }
  func.func @transform_2(%arg0: i32) -> (i32, i32) {
    %c0_i32 = arith.constant 0 : i32
    %c0_i32_0 = arith.constant 0 : i32
    %c0_i32_1 = arith.constant 0 : i32
    return %c0_i32, %c0_i32_0 : i32, i32
  }
  func.func @transform_3(%arg0: i32) -> (i32, i32) {
    %c0_i32 = arith.constant 0 : i32
    %c0_i32_0 = arith.constant 0 : i32
    return %arg0, %c0_i32 : i32, i32
  }
}

</mosaic_0001>

<llo_original>
// kernel: tpu_custom_call.1
$region0: #{tpu_custom_call.1}
  #allocation0 [shape = 'u32[]', space=smem, size = 0x4, offset = 0x4, fixed_abs, tag = 'smem constant byte address 0x4 - core index']
  #allocation1 [shape = 'u32[144,128]{1,0:T(1,128)}', space=vmem, size = 0x12000, scoped, tag = 'internal scratch']
  %s0 = inlined_call_operand.hbm [shape: f32[128,128], index: 0, kind: input, shape index: {}]
  %s1 = inlined_call_operand.hbm [shape: bf16[128,384], index: 1, kind: input, shape index: {}]
  %s2 = inlined_call_operand.vmem [shape: f32[1,384], index: 2, kind: input, shape index: {}]
  %s3 = inlined_call_operand.hbm [shape: bf16[128,384], index: 3, kind: output, shape index: {}]
  %s4 = sld [smem:[#allocation0]]
  $region30: #{tpu_custom_call.1} parent=0
    _
  %s6 = ssub.s32 1, %s4
  %s7 = scalar_select 0, %s6, %s4
  $region1: #{tpu_custom_call.1} parent=0
    #allocation2 [shape = 'u8[65536]{0}', space=vmem, size = 0x10000, scoped, tag = 'input window, operand 0, single buffered']
    #allocation3 [shape = 's32[1]{0}', space=sflag, size = 0x4, scoped, tag = 'scoped memory for tpu_custom_call.1']
    #allocation4 [shape = 's32[1]{0}', space=sflag, size = 0x4, scoped, tag = 'scoped memory for tpu_custom_call.1']
    #allocation5 [shape = 'u8[98304]{0}', space=vmem, size = 0x18000, scoped, tag = 'input window, operand 1, single buffered']
    #allocation6 [shape = 's32[1]{0}', space=sflag, size = 0x4, scoped, tag = 'scoped memory for tpu_custom_call.1']
    #allocation7 [shape = 'u8[98304]{0}', space=vmem, size = 0x18000, scoped, tag = 'output window, operand 0, single buffered']
    %8 = vsyncpa [#allocation3], 0
    %9 = vsyncpa [#allocation6], 0
    %10 = vsyncpa [#allocation4], 0
    // Predicated region
    $region2: #{tpu_custom_call.1} parent=1 // pred_check
      _
    $region3: #{tpu_custom_call.1} parent=1 // pred_check_branch
      %12 = sbr.rel (0) target = $region5
    $region4: #{tpu_custom_call.1} parent=1 // pred_region
      %s14 = ssub.s32 2048, 2048
      %15 = vsyncadd [#allocation3], %s14
      %s16 = sshll.u32 [#allocation2], 4
      %s17 = int_to_ptr.vmem [resolvable:$true] %s16
      %22 = dma.hbm_to_vmem [thread:$0]  %s0, 2048, %s17, [#allocation3], 128, 128, 8
    $region5: #{tpu_custom_call.1} parent=1 // pred_fallthru
      _
    // Predicated region
    $region6: #{tpu_custom_call.1} parent=1 // pred_check
      _
    $region7: #{tpu_custom_call.1} parent=1 // pred_check_branch
      %24 = sbr.rel (0) target = $region9
    $region8: #{tpu_custom_call.1} parent=1 // pred_region
      %s26 = ssub.s32 3072, 3072
      %27 = vsyncadd [#allocation6], %s26
      %s28 = sshll.u32 [#allocation5], 4
      %s29 = int_to_ptr.vmem [resolvable:$true] %s28
      %34 = dma.hbm_to_vmem [thread:$0]  %s1, 3072, %s29, [#allocation6], 192, 192, 12
    $region9: #{tpu_custom_call.1} parent=1 // pred_fallthru
      _
    // Predicated region
    $region10: #{tpu_custom_call.1} parent=1 // pred_check
      _
    $region11: #{tpu_custom_call.1} parent=1 // pred_check_branch
      %36 = sbr.rel (0) target = $region13
    $region12: #{tpu_custom_call.1} parent=1 // pred_region
      _
    $region13: #{tpu_custom_call.1} parent=1 // pred_fallthru
      _
    // Predicated region
    $region14: #{tpu_custom_call.1} parent=1 // pred_check
      _
    $region15: #{tpu_custom_call.1} parent=1 // pred_check_branch
      %38 = sbr.rel (0) target = $region17
    $region16: #{tpu_custom_call.1} parent=1 // pred_region
      %39 = dma.done [#allocation3], 2048
    $region17: #{tpu_custom_call.1} parent=1 // pred_fallthru
      _
    // Predicated region
    $region18: #{tpu_custom_call.1} parent=1 // pred_check
      _
    $region19: #{tpu_custom_call.1} parent=1 // pred_check_branch
      %41 = sbr.rel (0) target = $region21
    $region20: #{tpu_custom_call.1} parent=1 // pred_region
      %42 = dma.done [#allocation6], 3072
    $region21: #{tpu_custom_call.1} parent=1 // pred_fallthru
      _
    %v44 = vld [vmem:[#allocation2] sm:$0xff]
    %v45 = vld [vmem:[#allocation2 + $0x8] sm:$0xff]
    %v46 = vld [vmem:[#allocation2 + $0x10] sm:$0xff]
    %v47 = vld [vmem:[#allocation2 + $0x18] sm:$0xff]
    %v48 = vld [vmem:[#allocation2 + $0x20] sm:$0xff]
    %v49 = vld [vmem:[#allocation2 + $0x28] sm:$0xff]
    %v50 = vld [vmem:[#allocation2 + $0x30] sm:$0xff]
    %v51 = vld [vmem:[#allocation2 + $0x38] sm:$0xff]
    %v52 = vld [vmem:[#allocation2 + $0x40] sm:$0xff]
    %v53 = vld [vmem:[#allocation2 + $0x48] sm:$0xff]
    %v54 = vld [vmem:[#allocation2 + $0x50] sm:$0xff]
    %v55 = vld [vmem:[#allocation2 + $0x58] sm:$0xff]
    %v56 = vld [vmem:[#allocation2 + $0x60] sm:$0xff]
    %v57 = vld [vmem:[#allocation2 + $0x68] sm:$0xff]
    %v58 = vld [vmem:[#allocation2 + $0x70] sm:$0xff]
    %v59 = vld [vmem:[#allocation2 + $0x78] sm:$0xff]
    %v60 = vpack.c.bf16 %v45, %v44
    %v61 = vpack.c.bf16 %v47, %v46
    %v62 = vpack.c.bf16 %v49, %v48
    %v63 = vpack.c.bf16 %v51, %v50
    %v64 = vpack.c.bf16 %v53, %v52
    %v65 = vpack.c.bf16 %v55, %v54
    %v66 = vpack.c.bf16 %v57, %v56
    %v67 = vpack.c.bf16 %v59, %v58
    %v68 = vld [vmem:[#allocation5] sm:$0xff]
    %v69 = vld [vmem:[#allocation5 + $0x8] sm:$0xf]
    %v70 = vld [vmem:[#allocation5 + $0xc] sm:$0xff]
    %v71 = vld [vmem:[#allocation5 + $0x14] sm:$0xf]
    %v72 = vld [vmem:[#allocation5 + $0x18] sm:$0xff]
    %v73 = vld [vmem:[#allocation5 + $0x20] sm:$0xf]
    %v74 = vld [vmem:[#allocation5 + $0x24] sm:$0xff]
    %v75 = vld [vmem:[#allocation5 + $0x2c] sm:$0xf]
    %v76 = vld [vmem:[#allocation5 + $0x30] sm:$0xff]
    %v77 = vld [vmem:[#allocation5 + $0x38] sm:$0xf]
    %v78 = vld [vmem:[#allocation5 + $0x3c] sm:$0xff]
    %v79 = vld [vmem:[#allocation5 + $0x44] sm:$0xf]
    %v80 = vld [vmem:[#allocation5 + $0x48] sm:$0xff]
    %v81 = vld [vmem:[#allocation5 + $0x50] sm:$0xf]
    %v82 = vld [vmem:[#allocation5 + $0x54] sm:$0xff]
    %v83 = vld [vmem:[#allocation5 + $0x5c] sm:$0xf]
    %v84 = vld [vmem:[#allocation5 + $0x60] sm:$0xff]
    %v85 = vld [vmem:[#allocation5 + $0x68] sm:$0xf]
    %v86 = vld [vmem:[#allocation5 + $0x6c] sm:$0xff]
    %v87 = vld [vmem:[#allocation5 + $0x74] sm:$0xf]
    %v88 = vld [vmem:[#allocation5 + $0x78] sm:$0xff]
    %v89 = vld [vmem:[#allocation5 + $0x80] sm:$0xf]
    %v90 = vld [vmem:[#allocation5 + $0x84] sm:$0xff]
    %v91 = vld [vmem:[#allocation5 + $0x8c] sm:$0xf]
    %v92 = vld [vmem:[#allocation5 + $0x90] sm:$0xff]
    %v93 = vld [vmem:[#allocation5 + $0x98] sm:$0xf]
    %v94 = vld [vmem:[#allocation5 + $0x9c] sm:$0xff]
    %v95 = vld [vmem:[#allocation5 + $0xa4] sm:$0xf]
    %v96 = vld [vmem:[#allocation5 + $0xa8] sm:$0xff]
    %v97 = vld [vmem:[#allocation5 + $0xb0] sm:$0xf]
    %v98 = vld [vmem:[#allocation5 + $0xb4] sm:$0xff]
    %v99 = vld [vmem:[#allocation5 + $0xbc] sm:$0xf]
    %v100 = vld [vmem:[%s2] sm:$0x7]
    %v102 = vlaneseq
    %v103 = vshrl.u32 %v102, 7
    %v104 = vsub.s32 0, %v103
    %v105 = vrot.slane %v100, %v104
    %v106 = vlaneseq
    %v107 = vshrl.u32 %v106, 7
    %v108 = vsub.s32 1, %v107
    %v109 = vrot.slane %v100, %v108
    %v110 = vlaneseq
    %v111 = vshrl.u32 %v110, 7
    %v112 = vsub.s32 2, %v111
    %v113 = vrot.slane %v100, %v112
    %v149 = vunpack.c.l.b16 %v68
    %v150 = vunpack.c.h.b16 %v68
    %v151 = vunpack.c.l.b16 %v69
    %v152 = vunpack.c.l.b16 %v70
    %v153 = vunpack.c.h.b16 %v70
    %v154 = vunpack.c.l.b16 %v71
    %v155 = vunpack.c.l.b16 %v72
    %v156 = vunpack.c.h.b16 %v72
    %v157 = vunpack.c.l.b16 %v73
    %v158 = vunpack.c.l.b16 %v74
    %v159 = vunpack.c.h.b16 %v74
    %v160 = vunpack.c.l.b16 %v75
    %v161 = vunpack.c.l.b16 %v76
    %v162 = vunpack.c.h.b16 %v76
    %v163 = vunpack.c.l.b16 %v77
    %v164 = vunpack.c.l.b16 %v78
    %v165 = vunpack.c.h.b16 %v78
    %v166 = vunpack.c.l.b16 %v79
    %v167 = vunpack.c.l.b16 %v80
    %v168 = vunpack.c.h.b16 %v80
    %v169 = vunpack.c.l.b16 %v81
    %v170 = vunpack.c.l.b16 %v82
    %v171 = vunpack.c.h.b16 %v82
    %v172 = vunpack.c.l.b16 %v83
    %v173 = vunpack.c.l.b16 %v84
    %v174 = vunpack.c.h.b16 %v84
    %v175 = vunpack.c.l.b16 %v85
    %v176 = vunpack.c.l.b16 %v86
    %v177 = vunpack.c.h.b16 %v86
    %v178 = vunpack.c.l.b16 %v87
    %v179 = vunpack.c.l.b16 %v88
    %v180 = vunpack.c.h.b16 %v88
    %v181 = vunpack.c.l.b16 %v89
    %v182 = vunpack.c.l.b16 %v90
    %v183 = vunpack.c.h.b16 %v90
    %v184 = vunpack.c.l.b16 %v91
    %v185 = vunpack.c.l.b16 %v92
    %v186 = vunpack.c.h.b16 %v92
    %v187 = vunpack.c.l.b16 %v93
    %v188 = vunpack.c.l.b16 %v94
    %v189 = vunpack.c.h.b16 %v94
    %v190 = vunpack.c.l.b16 %v95
    %v191 = vunpack.c.l.b16 %v96
    %v192 = vunpack.c.h.b16 %v96
    %v193 = vunpack.c.l.b16 %v97
    %v194 = vunpack.c.l.b16 %v98
    %v195 = vunpack.c.h.b16 %v98
    %v196 = vunpack.c.l.b16 %v99
    %v197 = vpack.c.b16 %v152, %v149
    %v198 = vpack.c.b16 %v153, %v150
    %v199 = vpack.c.b16 %v154, %v151
    %v200 = vpack.c.b16 %v158, %v155
    %v201 = vpack.c.b16 %v159, %v156
    %v202 = vpack.c.b16 %v160, %v157
    %v203 = vpack.c.b16 %v164, %v161
    %v204 = vpack.c.b16 %v165, %v162
    %v205 = vpack.c.b16 %v166, %v163
    %v206 = vpack.c.b16 %v170, %v167
    %v207 = vpack.c.b16 %v171, %v168
    %v208 = vpack.c.b16 %v172, %v169
    %v209 = vpack.c.b16 %v176, %v173
    %v210 = vpack.c.b16 %v177, %v174
    %v211 = vpack.c.b16 %v178, %v175
    %v212 = vpack.c.b16 %v182, %v179
    %v213 = vpack.c.b16 %v183, %v180
    %v214 = vpack.c.b16 %v184, %v181
    %v215 = vpack.c.b16 %v188, %v185
    %v216 = vpack.c.b16 %v189, %v186
    %v217 = vpack.c.b16 %v190, %v187
    %v218 = vpack.c.b16 %v194, %v191
    %v219 = vpack.c.b16 %v195, %v192
    %v220 = vpack.c.b16 %v196, %v193
    %245 = vmatprep.subr.bf16.mxu0 %v198
    %246 = vmatpush1.bf16.msra.mxu0 %v197
    %247 = vmatprep.subr.bf16.mxu0 %v201
    %248 = vmatpush1.bf16.msra.mxu0 %v200
    %249 = vmatprep.subr.bf16.mxu0 %v204
    %250 = vmatpush1.bf16.msra.mxu0 %v203
    %251 = vmatprep.subr.bf16.mxu0 %v207
    %252 = vmatpush1.bf16.msra.mxu0 %v206
    %253 = vmatprep.subr.bf16.mxu0 %v210
    %254 = vmatpush1.bf16.msra.mxu0 %v209
    %255 = vmatprep.subr.bf16.mxu0 %v213
    %256 = vmatpush1.bf16.msra.mxu0 %v212
    %257 = vmatprep.subr.bf16.mxu0 %v216
    %258 = vmatpush1.bf16.msra.mxu0 %v215
    %259 = vmatprep.subr.bf16.mxu0 %v219
    %260 = vmatpush1.bf16.msra.mxu0 %v218
    %261 = vmatprep.subr.bf16.mxu0 0
    %262 = vmatpush1.bf16.msra.mxu0 0
    %263 = vmatprep.subr.bf16.mxu0 0
    %264 = vmatpush1.bf16.msra.mxu0 0
    %265 = vmatprep.subr.bf16.mxu0 0
    %266 = vmatpush1.bf16.msra.mxu0 0
    %267 = vmatprep.subr.bf16.mxu0 0
    %268 = vmatpush1.bf16.msra.mxu0 0
    %269 = vmatprep.subr.bf16.mxu0 0
    %270 = vmatpush1.bf16.msra.mxu0 0
    %271 = vmatprep.subr.bf16.mxu0 0
    %272 = vmatpush1.bf16.msra.mxu0 0
    %273 = vmatprep.subr.bf16.mxu0 0
    %274 = vmatpush1.bf16.msra.mxu0 0
    %275 = vmatprep.subr.bf16.mxu0 0
    %276 = vmatpush1.bf16.msra.mxu0 0
    %277 = vmatprep.mubr.bf16.mxu0 0
    %278 = vmatmul.mubr.bf16.gmra.mrb[0].mxu0 %v60
    %v279 = vpop.f32.mrb[0].mxu0
    %v280 = vadd.f32 %v105, %v279
    %v281 = vpop.f32.mrb[0].mxu0
    %v282 = vadd.f32 %v109, %v281
    %v283 = vpop.f32.mrb[0].mxu0
    %v284 = vadd.f32 %v105, %v283
    %v285 = vpop.f32.mrb[0].mxu0
    %v286 = vadd.f32 %v109, %v285
    %287 = vmatprep.mubr.bf16.mxu0 0
    %288 = vmatmul.mubr.bf16.gmra.mrb[0].mxu0 %v61
    %v289 = vpop.f32.mrb[0].mxu0
    %v290 = vadd.f32 %v105, %v289
    %v291 = vpop.f32.mrb[0].mxu0
    %v292 = vadd.f32 %v109, %v291
    %v293 = vpop.f32.mrb[0].mxu0
    %v294 = vadd.f32 %v105, %v293
    %v295 = vpop.f32.mrb[0].mxu0
    %v296 = vadd.f32 %v109, %v295
    %297 = vmatprep.mubr.bf16.mxu0 0
    %298 = vmatmul.mubr.bf16.gmra.mrb[0].mxu0 %v62
    %v299 = vpop.f32.mrb[0].mxu0
    %v300 = vadd.f32 %v105, %v299
    %v301 = vpop.f32.mrb[0].mxu0
    %v302 = vadd.f32 %v109, %v301
    %v303 = vpop.f32.mrb[0].mxu0
    %v304 = vadd.f32 %v105, %v303
    %v305 = vpop.f32.mrb[0].mxu0
    %v306 = vadd.f32 %v109, %v305
    %307 = vmatprep.mubr.bf16.mxu0 0
    %308 = vmatmul.mubr.bf16.gmra.mrb[0].mxu0 %v63
    %v309 = vpop.f32.mrb[0].mxu0
    %v310 = vadd.f32 %v105, %v309
    %v311 = vpop.f32.mrb[0].mxu0
    %v312 = vadd.f32 %v109, %v311
    %v313 = vpop.f32.mrb[0].mxu0
    %v314 = vadd.f32 %v105, %v313
    %v315 = vpop.f32.mrb[0].mxu0
    %v316 = vadd.f32 %v109, %v315
    %317 = vmatprep.mubr.bf16.mxu0 0
    %318 = vmatmul.mubr.bf16.gmra.mrb[0].mxu0 %v64
    %v319 = vpop.f32.mrb[0].mxu0
    %v320 = vadd.f32 %v105, %v319
    %v321 = vpop.f32.mrb[0].mxu0
    %v322 = vadd.f32 %v109, %v321
    %v323 = vpop.f32.mrb[0].mxu0
    %v324 = vadd.f32 %v105, %v323
    %v325 = vpop.f32.mrb[0].mxu0
    %v326 = vadd.f32 %v109, %v325
    %327 = vmatprep.mubr.bf16.mxu0 0
    %328 = vmatmul.mubr.bf16.gmra.mrb[0].mxu0 %v65
    %v329 = vpop.f32.mrb[0].mxu0
    %v330 = vadd.f32 %v105, %v329
    %v331 = vpop.f32.mrb[0].mxu0
    %v332 = vadd.f32 %v109, %v331
    %v333 = vpop.f32.mrb[0].mxu0
    %v334 = vadd.f32 %v105, %v333
    %v335 = vpop.f32.mrb[0].mxu0
    %v336 = vadd.f32 %v109, %v335
    %337 = vmatprep.mubr.bf16.mxu0 0
    %338 = vmatmul.mubr.bf16.gmra.mrb[0].mxu0 %v66
    %v339 = vpop.f32.mrb[0].mxu0
    %v340 = vadd.f32 %v105, %v339
    %v341 = vpop.f32.mrb[0].mxu0
    %v342 = vadd.f32 %v109, %v341
    %v343 = vpop.f32.mrb[0].mxu0
    %v344 = vadd.f32 %v105, %v343
    %v345 = vpop.f32.mrb[0].mxu0
    %v346 = vadd.f32 %v109, %v345
    %347 = vmatprep.mubr.bf16.mxu0 0
    %348 = vmatmul.mubr.bf16.gmra.mrb[0].mxu0 %v67
    %v349 = vpop.f32.mrb[0].mxu0
    %v350 = vadd.f32 %v105, %v349
    %v351 = vpop.f32.mrb[0].mxu0
    %v352 = vadd.f32 %v109, %v351
    %v353 = vpop.f32.mrb[0].mxu0
    %v354 = vadd.f32 %v105, %v353
    %v355 = vpop.f32.mrb[0].mxu0
    %v356 = vadd.f32 %v109, %v355
    %357 = vdwg.mxu0
    %358 = vmatprep.subr.bf16.mxu0 0
    %359 = vmatpush1.bf16.msra.mxu0 %v199
    %360 = vmatprep.subr.bf16.mxu0 0
    %361 = vmatpush1.bf16.msra.mxu0 %v202
    %362 = vmatprep.subr.bf16.mxu0 0
    %363 = vmatpush1.bf16.msra.mxu0 %v205
    %364 = vmatprep.subr.bf16.mxu0 0
    %365 = vmatpush1.bf16.msra.mxu0 %v208
    %366 = vmatprep.subr.bf16.mxu0 0
    %367 = vmatpush1.bf16.msra.mxu0 %v211
    %368 = vmatprep.subr.bf16.mxu0 0
    %369 = vmatpush1.bf16.msra.mxu0 %v214
    %370 = vmatprep.subr.bf16.mxu0 0
    %371 = vmatpush1.bf16.msra.mxu0 %v217
    %372 = vmatprep.subr.bf16.mxu0 0
    %373 = vmatpush1.bf16.msra.mxu0 %v220
    %374 = vmatprep.subr.bf16.mxu0 0
    %375 = vmatpush1.bf16.msra.mxu0 0
    %376 = vmatprep.subr.bf16.mxu0 0
    %377 = vmatpush1.bf16.msra.mxu0 0
    %378 = vmatprep.subr.bf16.mxu0 0
    %379 = vmatpush1.bf16.msra.mxu0 0
    %380 = vmatprep.subr.bf16.mxu0 0
    %381 = vmatpush1.bf16.msra.mxu0 0
    %382 = vmatprep.subr.bf16.mxu0 0
    %383 = vmatpush1.bf16.msra.mxu0 0
    %384 = vmatprep.subr.bf16.mxu0 0
    %385 = vmatpush1.bf16.msra.mxu0 0
    %386 = vmatprep.subr.bf16.mxu0 0
    %387 = vmatpush1.bf16.msra.mxu0 0
    %388 = vmatprep.subr.bf16.mxu0 0
    %389 = vmatpush1.bf16.msra.mxu0 0
    %390 = vmatprep.mubr.bf16.mxu0 0
    %391 = vmatmul.mubr.bf16.gmra.mrb[0].mxu0 %v60
    %v392 = vpop.f32.mrb[0].mxu0
    %v393 = vadd.f32 %v113, %v392
    %v394 = vpop.f32.mrb[0].mxu0
    %v395 = vpop.f32.mrb[0].mxu0
    %v396 = vadd.f32 %v113, %v395
    %v397 = vpop.f32.mrb[0].mxu0
    %398 = vmatprep.mubr.bf16.mxu0 0
    %399 = vmatmul.mubr.bf16.gmra.mrb[0].mxu0 %v61
    %v400 = vpop.f32.mrb[0].mxu0
    %v401 = vadd.f32 %v113, %v400
    %v402 = vpop.f32.mrb[0].mxu0
    %v403 = vpop.f32.mrb[0].mxu0
    %v404 = vadd.f32 %v113, %v403
    %v405 = vpop.f32.mrb[0].mxu0
    %406 = vmatprep.mubr.bf16.mxu0 0
    %407 = vmatmul.mubr.bf16.gmra.mrb[0].mxu0 %v62
    %v408 = vpop.f32.mrb[0].mxu0
    %v409 = vadd.f32 %v113, %v408
    %v410 = vpop.f32.mrb[0].mxu0
    %v411 = vpop.f32.mrb[0].mxu0
    %v412 = vadd.f32 %v113, %v411
    %v413 = vpop.f32.mrb[0].mxu0
    %414 = vmatprep.mubr.bf16.mxu0 0
    %415 = vmatmul.mubr.bf16.gmra.mrb[0].mxu0 %v63
    %v416 = vpop.f32.mrb[0].mxu0
    %v417 = vadd.f32 %v113, %v416
    %v418 = vpop.f32.mrb[0].mxu0
    %v419 = vpop.f32.mrb[0].mxu0
    %v420 = vadd.f32 %v113, %v419
    %v421 = vpop.f32.mrb[0].mxu0
    %422 = vmatprep.mubr.bf16.mxu0 0
    %423 = vmatmul.mubr.bf16.gmra.mrb[0].mxu0 %v64
    %v424 = vpop.f32.mrb[0].mxu0
    %v425 = vadd.f32 %v113, %v424
    %v426 = vpop.f32.mrb[0].mxu0
    %v427 = vpop.f32.mrb[0].mxu0
    %v428 = vadd.f32 %v113, %v427
    %v429 = vpop.f32.mrb[0].mxu0
    %430 = vmatprep.mubr.bf16.mxu0 0
    %431 = vmatmul.mubr.bf16.gmra.mrb[0].mxu0 %v65
    %v432 = vpop.f32.mrb[0].mxu0
    %v433 = vadd.f32 %v113, %v432
    %v434 = vpop.f32.mrb[0].mxu0
    %v435 = vpop.f32.mrb[0].mxu0
    %v436 = vadd.f32 %v113, %v435
    %v437 = vpop.f32.mrb[0].mxu0
    %438 = vmatprep.mubr.bf16.mxu0 0
    %439 = vmatmul.mubr.bf16.gmra.mrb[0].mxu0 %v66
    %v440 = vpop.f32.mrb[0].mxu0
    %v441 = vadd.f32 %v113, %v440
    %v442 = vpop.f32.mrb[0].mxu0
    %v443 = vpop.f32.mrb[0].mxu0
    %v444 = vadd.f32 %v113, %v443
    %v445 = vpop.f32.mrb[0].mxu0
    %446 = vmatprep.mubr.bf16.mxu0 0
    %447 = vmatmul.mubr.bf16.gmra.mrb[0].mxu0 %v67
    %v448 = vpop.f32.mrb[0].mxu0
    %v449 = vadd.f32 %v113, %v448
    %v450 = vpop.f32.mrb[0].mxu0
    %v451 = vpop.f32.mrb[0].mxu0
    %v452 = vadd.f32 %v113, %v451
    %v453 = vpop.f32.mrb[0].mxu0
    %454 = vdwg.mxu0
    %v455 = vpack.c.bf16 %v284, %v280
    %v456 = vpack.c.bf16 %v286, %v282
    %v457 = vpack.c.bf16 %v396, %v393
    %v458 = vpack.c.bf16 %v294, %v290
    %v459 = vpack.c.bf16 %v296, %v292
    %v460 = vpack.c.bf16 %v404, %v401
    %v461 = vpack.c.bf16 %v304, %v300
    %v462 = vpack.c.bf16 %v306, %v302
    %v463 = vpack.c.bf16 %v412, %v409
    %v464 = vpack.c.bf16 %v314, %v310
    %v465 = vpack.c.bf16 %v316, %v312
    %v466 = vpack.c.bf16 %v420, %v417
    %v467 = vpack.c.bf16 %v324, %v320
    %v468 = vpack.c.bf16 %v326, %v322
    %v469 = vpack.c.bf16 %v428, %v425
    %v470 = vpack.c.bf16 %v334, %v330
    %v471 = vpack.c.bf16 %v336, %v332
    %v472 = vpack.c.bf16 %v436, %v433
    %v473 = vpack.c.bf16 %v344, %v340
    %v474 = vpack.c.bf16 %v346, %v342
    %v475 = vpack.c.bf16 %v444, %v441
    %v476 = vpack.c.bf16 %v354, %v350
    %v477 = vpack.c.bf16 %v356, %v352
    %v478 = vpack.c.bf16 %v452, %v449
    %v503 = vunpack.c.l.b16 %v455
    %v504 = vunpack.c.l.b16 %v456
    %v505 = vunpack.c.l.b16 %v457
    %v506 = vunpack.c.h.b16 %v455
    %v507 = vunpack.c.h.b16 %v456
    %v508 = vunpack.c.h.b16 %v457
    %v509 = vunpack.c.l.b16 %v458
    %v510 = vunpack.c.l.b16 %v459
    %v511 = vunpack.c.l.b16 %v460
    %v512 = vunpack.c.h.b16 %v458
    %v513 = vunpack.c.h.b16 %v459
    %v514 = vunpack.c.h.b16 %v460
    %v515 = vunpack.c.l.b16 %v461
    %v516 = vunpack.c.l.b16 %v462
    %v517 = vunpack.c.l.b16 %v463
    %v518 = vunpack.c.h.b16 %v461
    %v519 = vunpack.c.h.b16 %v462
    %v520 = vunpack.c.h.b16 %v463
    %v521 = vunpack.c.l.b16 %v464
    %v522 = vunpack.c.l.b16 %v465
    %v523 = vunpack.c.l.b16 %v466
    %v524 = vunpack.c.h.b16 %v464
    %v525 = vunpack.c.h.b16 %v465
    %v526 = vunpack.c.h.b16 %v466
    %v527 = vunpack.c.l.b16 %v467
    %v528 = vunpack.c.l.b16 %v468
    %v529 = vunpack.c.l.b16 %v469
    %v530 = vunpack.c.h.b16 %v467
    %v531 = vunpack.c.h.b16 %v468
    %v532 = vunpack.c.h.b16 %v469
    %v533 = vunpack.c.l.b16 %v470
    %v534 = vunpack.c.l.b16 %v471
    %v535 = vunpack.c.l.b16 %v472
    %v536 = vunpack.c.h.b16 %v470
    %v537 = vunpack.c.h.b16 %v471
    %v538 = vunpack.c.h.b16 %v472
    %v539 = vunpack.c.l.b16 %v473
    %v540 = vunpack.c.l.b16 %v474
    %v541 = vunpack.c.l.b16 %v475
    %v542 = vunpack.c.h.b16 %v473
    %v543 = vunpack.c.h.b16 %v474
    %v544 = vunpack.c.h.b16 %v475
    %v545 = vunpack.c.l.b16 %v476
    %v546 = vunpack.c.l.b16 %v477
    %v547 = vunpack.c.l.b16 %v478
    %v548 = vunpack.c.h.b16 %v476
    %v549 = vunpack.c.h.b16 %v477
    %v550 = vunpack.c.h.b16 %v478
    %v551 = vpack.c.b16 %v504, %v503
    %v552 = vpack.c.b16 %v505, %v505
    %v553 = vpack.c.b16 %v507, %v506
    %v554 = vpack.c.b16 %v508, %v508
    %v555 = vpack.c.b16 %v510, %v509
    %v556 = vpack.c.b16 %v511, %v511
    %v557 = vpack.c.b16 %v513, %v512
    %v558 = vpack.c.b16 %v514, %v514
    %v559 = vpack.c.b16 %v516, %v515
    %v560 = vpack.c.b16 %v517, %v517
    %v561 = vpack.c.b16 %v519, %v518
    %v562 = vpack.c.b16 %v520, %v520
    %v563 = vpack.c.b16 %v522, %v521
    %v564 = vpack.c.b16 %v523, %v523
    %v565 = vpack.c.b16 %v525, %v524
    %v566 = vpack.c.b16 %v526, %v526
    %v567 = vpack.c.b16 %v528, %v527
    %v568 = vpack.c.b16 %v529, %v529
    %v569 = vpack.c.b16 %v531, %v530
    %v570 = vpack.c.b16 %v532, %v532
    %v571 = vpack.c.b16 %v534, %v533
    %v572 = vpack.c.b16 %v535, %v535
    %v573 = vpack.c.b16 %v537, %v536
    %v574 = vpack.c.b16 %v538, %v538
    %v575 = vpack.c.b16 %v540, %v539
    %v576 = vpack.c.b16 %v541, %v541
    %v577 = vpack.c.b16 %v543, %v542
    %v578 = vpack.c.b16 %v544, %v544
    %v579 = vpack.c.b16 %v546, %v545
    %v580 = vpack.c.b16 %v547, %v547
    %v581 = vpack.c.b16 %v549, %v548
    %v582 = vpack.c.b16 %v550, %v550
    %615 = vst [vmem:[#allocation7] sm:$0xff] %v551
    %616 = vst [vmem:[#allocation7 + $0x8] sm:$0xf] %v552
    %617 = vst [vmem:[#allocation7 + $0xc] sm:$0xff] %v553
    %618 = vst [vmem:[#allocation7 + $0x14] sm:$0xf] %v554
    %619 = vst [vmem:[#allocation7 + $0x18] sm:$0xff] %v555
    %620 = vst [vmem:[#allocation7 + $0x20] sm:$0xf] %v556
    %621 = vst [vmem:[#allocation7 + $0x24] sm:$0xff] %v557
    %622 = vst [vmem:[#allocation7 + $0x2c] sm:$0xf] %v558
    %623 = vst [vmem:[#allocation7 + $0x30] sm:$0xff] %v559
    %624 = vst [vmem:[#allocation7 + $0x38] sm:$0xf] %v560
    %625 = vst [vmem:[#allocation7 + $0x3c] sm:$0xff] %v561
    %626 = vst [vmem:[#allocation7 + $0x44] sm:$0xf] %v562
    %627 = vst [vmem:[#allocation7 + $0x48] sm:$0xff] %v563
    %628 = vst [vmem:[#allocation7 + $0x50] sm:$0xf] %v564
    %629 = vst [vmem:[#allocation7 + $0x54] sm:$0xff] %v565
    %630 = vst [vmem:[#allocation7 + $0x5c] sm:$0xf] %v566
    %631 = vst [vmem:[#allocation7 + $0x60] sm:$0xff] %v567
    %632 = vst [vmem:[#allocation7 + $0x68] sm:$0xf] %v568
    %633 = vst [vmem:[#allocation7 + $0x6c] sm:$0xff] %v569
    %634 = vst [vmem:[#allocation7 + $0x74] sm:$0xf] %v570
    %635 = vst [vmem:[#allocation7 + $0x78] sm:$0xff] %v571
    %636 = vst [vmem:[#allocation7 + $0x80] sm:$0xf] %v572
    %637 = vst [vmem:[#allocation7 + $0x84] sm:$0xff] %v573
    %638 = vst [vmem:[#allocation7 + $0x8c] sm:$0xf] %v574
    %639 = vst [vmem:[#allocation7 + $0x90] sm:$0xff] %v575
    %640 = vst [vmem:[#allocation7 + $0x98] sm:$0xf] %v576
    %641 = vst [vmem:[#allocation7 + $0x9c] sm:$0xff] %v577
    %642 = vst [vmem:[#allocation7 + $0xa4] sm:$0xf] %v578
    %643 = vst [vmem:[#allocation7 + $0xa8] sm:$0xff] %v579
    %644 = vst [vmem:[#allocation7 + $0xb0] sm:$0xf] %v580
    %645 = vst [vmem:[#allocation7 + $0xb4] sm:$0xff] %v581
    %646 = vst [vmem:[#allocation7 + $0xbc] sm:$0xf] %v582
    // Predicated region
    $region22: #{tpu_custom_call.1} parent=1 // pred_check
      _
    $region23: #{tpu_custom_call.1} parent=1 // pred_check_branch
      %648 = sbr.rel (0) target = $region25
    $region24: #{tpu_custom_call.1} parent=1 // pred_region
      %s650 = ssub.s32 3072, 3072
      %651 = vsyncadd [#allocation4], %s650
      %s652 = sshll.u32 [#allocation7], 4
      %s653 = int_to_ptr.vmem [resolvable:$true] %s652
      %658 = dma.vmem_to_hbm [thread:$0]  %s653, 3072, %s3, [#allocation4], 192, 192, 12
    $region25: #{tpu_custom_call.1} parent=1 // pred_fallthru
      _
    // Predicated region
    $region26: #{tpu_custom_call.1} parent=1 // pred_check
      _
    $region27: #{tpu_custom_call.1} parent=1 // pred_check_branch
      %660 = sbr.rel (0) target = $region29
    $region28: #{tpu_custom_call.1} parent=1 // pred_region
      %661 = dma.done [#allocation4], 3072
    $region29: #{tpu_custom_call.1} parent=1 // pred_fallthru
      _
    %662 = vsyncpa [#allocation3], 1
    %663 = vsyncpa [#allocation6], 1
    %664 = vsyncpa [#allocation4], 1

</llo_original>
